<compile_context>
chip_gen: v5e
topology: v5e:2x2
jax: 0.10.0
libtpu: 0.0.40
codegen_flags: <defaults>
</compile_context>

<pallas_src>
import numpy as np
import jax
import jax.numpy as jnp
from jax.experimental import pallas as pl
from jax.experimental.pallas import tpu as pltpu

EPS = 1e-5

# MXU operand precision (per perf review).  bf16 operands run the MXU at full rate on
# v5e/v6e/v7x and halve activation VMEM; accumulation and all BN/ReLU math stay f32.
MXU_DTYPE = jnp.bfloat16


# ----------------------------- Pallas kernel --------------------------------

def _up_double_conv_kernel(x2_ref, x1_ref, rwb_ref, rhn_ref, w1_ref, w2_ref,
                           s1_ref, s2_ref, g1_ref, bb1_ref, g2_ref, bb2_ref,
                           out_ref):
    """Fused upsample + pad + concat + DoubleConv (train-mode BatchNorm).

    Lane layouts are channel-major: lane = c*W + w.
      x2_ref : (N, H, C2*W)        skip connection (no padding)
      x1_ref : (N*H1, C1*W1)       flattened low-res input
      rwb_ref: (C1*W1, C1*W)       block-diag bilinear width-interp (pad-X folded), bf16
      rhn_ref: (N*H, N*H1)         block-diag bilinear row-interp (pad-Y folded), bf16
      w1_ref : (3*(C2+C1)*W, Cm*W) conv1 band matrix, ky taps stacked along K, bf16
      w2_ref : (3*Cm*W, Co*W)      conv2 band matrix, bf16
      s1/s2  : (C*W, C*W)          BN group-mean + lane-broadcast matrices (1/count folded)
      g*/bb* : (1, C*W)            BN gamma/beta pre-broadcast to the lane layout
      out_ref: (N, H, Co*W)        lane-dense output (128-lane unmasked store)
    """
    N, H, C2W = x2_ref.shape
    M = N * H
    CoW = out_ref.shape[2]
    f32 = jnp.float32

    # ---- fused bilinear 2x upsample (align_corners=True) + F.pad: 2 batched matmuls.
    v = jnp.dot(x1_ref[...].astype(MXU_DTYPE), rwb_ref[...],
                preferred_element_type=f32)                    # (N*H1, C1*W)  width
    u = jnp.dot(rhn_ref[...], v.astype(MXU_DTYPE),
                preferred_element_type=f32)                    # (M,    C1*W)  height

    # ---- channel concat == free lane concat: lanes [0:C2W] = x2, [C2W:] = up(x1).
    xcat = jnp.concatenate([x2_ref[...].reshape(M, C2W), u], axis=1)   # (M, 128)

    # Row index within each image; used to zero the conv halo rows after sublane rolls.
    hmod = jax.lax.broadcasted_iota(jnp.int32, (M, 1), 0) % H

    def shift_rows(a, up_by_one):
        # up_by_one=True : row i holds a[i-1] (ky=0 tap), zeroed where h == 0
        # up_by_one=False: row i holds a[i+1] (ky=2 tap), zeroed where h == H-1
        # Wrap-around and cross-image rows are exactly the masked rows.
        if up_by_one:
            return jnp.where(hmod != 0, pltpu.roll(a, 1, axis=0), 0.0)
        return jnp.where(hmod != H - 1, pltpu.roll(a, M - 1, axis=0), 0.0)

    def conv3x3(a, w_ref):
        # K-stack the 3 row taps -> a single MXU matmul per conv (kx taps and the
        # W zero-padding are folded into the band matrix).
        stacked = jnp.concatenate(
            [shift_rows(a, True), a, shift_rows(a, False)], axis=1)
        return jnp.dot(stacked.astype(MXU_DTYPE), w_ref[...],
                       preferred_element_type=f32)

    def bn_relu(acc, s_ref, g_ref, b_ref):
        # training-mode BatchNorm: batch statistics over (N, H, W), biased variance.
        # Reduce over rows first (XLU), then one tiny (1,CW)x(CW,CW) group-mean matmul
        # per statistic; var = E[x^2] - mean^2 keeps the two matmuls independent.
        sums = jnp.sum(acc, axis=0, keepdims=True)             # (1, C*W)
        sqs = jnp.sum(acc * acc, axis=0, keepdims=True)        # (1, C*W)
        mean = jnp.dot(sums, s_ref[...], preferred_element_type=f32)
        ex2 = jnp.dot(sqs, s_ref[...], preferred_element_type=f32)
        var = ex2 - mean * mean
        y = (acc - mean) * (jax.lax.rsqrt(var + EPS) * g_ref[...]) + b_ref[...]
        return jnp.maximum(y, 0.0)

    y1 = bn_relu(conv3x3(xcat, w1_ref), s1_ref, g1_ref, bb1_ref)   # (M, Cm*W)
    y2 = bn_relu(conv3x3(y1, w2_ref), s2_ref, g2_ref, bb2_ref)     # (M, Co*W)

    out_ref[...] = y2.reshape(N, H, CoW).astype(out_ref.dtype)     # 128-lane store


def _pallas_up_double_conv(x2cm, x1f, rwb, rhn, w1s, w2s, s1, s2,
                           g1b, b1v, g2b, b2v):
    N, H, C2W = x2cm.shape
    NH1, C1W1 = x1f.shape
    C1W = rwb.shape[1]
    CmW = w1s.shape[1]
    CoW = w2s.shape[1]
    M = N * H

    operands = (x2cm, x1f, rwb, rhn, w1s, w2s, s1, s2, g1b, b1v, g2b, b2v)

    def full(shape):
        return pl.BlockSpec(shape, lambda i: (0,) * len(shape))

    flops = (2 * NH1 * C1W1 * C1W + 2 * M * NH1 * C1W            # upsample
             + 2 * M * (3 * (C2W + C1W)) * CmW                   # conv1 (single matmul)
             + 2 * M * (3 * CmW) * CoW                           # conv2 (single matmul)
             + 2 * 2 * CmW * CmW + 2 * 2 * CoW * CoW)            # BN group means
    bytes_accessed = (sum(int(np.prod(o.shape)) * o.dtype.itemsize for o in operands)
                      + 4 * N * H * CoW)

    return pl.pallas_call(
        _up_double_conv_kernel,
        out_shape=jax.ShapeDtypeStruct((N, H, CoW), jnp.float32),
        grid_spec=pltpu.PrefetchScalarGridSpec(
            num_scalar_prefetch=0,
            grid=(1,),
            in_specs=[full(o.shape) for o in operands],
            out_specs=full((N, H, CoW)),
        ),
        compiler_params=pltpu.CompilerParams(dimension_semantics=("arbitrary",)),
        cost_estimate=pl.CostEstimate(flops=int(flops),
                                      transcendentals=int(CmW + CoW),
                                      bytes_accessed=int(bytes_accessed)),
    )(*operands)


# ------------------------ wrapper-side constant builders ----------------------

def _interp_matrix_np(n_in, n_out):
    """Bilinear align_corners=True interpolation matrix (n_out, n_in)."""
    m = np.zeros((n_out, n_in), np.float32)
    if n_in == 1 or n_out == 1:
        m[:, 0] = 1.0
        return m
    src = np.arange(n_out, dtype=np.float32) * np.float32(n_in - 1) / np.float32(n_out - 1)
    i0 = np.clip(np.floor(src).astype(np.int64), 0, n_in - 1)
    i1 = np.clip(i0 + 1, 0, n_in - 1)
    f = (src - i0).astype(np.float32)
    rows = np.arange(n_out)
    np.add.at(m, (rows, i0), 1.0 - f)
    np.add.at(m, (rows, i1), f)
    return m


def _block_diag_w_np(RW, C):
    """Block-diagonal (C*W_in, C*W_out) matrix applying RW along W per channel."""
    Wo, Wi = RW.shape
    m = np.zeros((C * Wi, C * Wo), np.float32)
    for c in range(C):
        m[c * Wi:(c + 1) * Wi, c * Wo:(c + 1) * Wo] = RW.T
    return m


def _group_mean_matrix_np(C, W, count):
    """S[i, j] = 1/count if lane i and j belong to the same channel (channel-major)."""
    ch = np.arange(C * W) // W
    return (ch[:, None] == ch[None, :]).astype(np.float32) / np.float32(count)


def _band_matrices(w_hwio, W):
    """Fold the kx taps + W zero-padding of a 3x3 conv into 3 (Cin*W, Cout*W) matrices.

    B[ky][ci*W + wi, co*W + wo] = w[ky, kx, ci, co] with kx = wi - wo + 1 (else 0).
    """
    kh, kw, cin, cout = w_hwio.shape
    P = np.zeros((kw, W, W), np.float32)
    for kx in range(kw):
        for wo in range(W):
            wi = wo + kx - (kw // 2)
            if 0 <= wi < W:
                P[kx, wi, wo] = 1.0
    B = jnp.einsum('ykic,kab->yiacb', w_hwio, jnp.asarray(P),
                   precision=jax.lax.Precision.HIGHEST)
    return B.reshape(kh, cin * W, cout * W)


# --------------------------------- forward -----------------------------------

def up_forward(x1, x2, w1, w2, g1, b1, g2, b2):
    """Pallas-backed Up.forward.  x1, x2 in NCHW (f32); conv weights in HWIO layout
    (ky, kx, Cin, Cout) == torch weight.permute(2, 3, 1, 0).  Returns NCHW."""
    N, C1, H1, W1 = x1.shape
    _, C2, H2, W2 = x2.shape
    Cmid = w1.shape[3]
    Cout = w2.shape[3]
    Hup, Wup = 2 * H1, 2 * W1
    diffY, diffX = H2 - Hup, W2 - Wup
    # NOTE: assumes diffY, diffX >= 0 (x2 at least as large as 2*x1), as in the UNet.

    # Bilinear 2x (align_corners=True) interpolation matrices with the F.pad offsets
    # folded in; the whole upsample + pad becomes two batched in-kernel matmuls.
    RH = np.zeros((H2, H1), np.float32)
    RH[diffY // 2: diffY // 2 + Hup, :] = _interp_matrix_np(H1, Hup)
    RW = np.zeros((W2, W1), np.float32)
    RW[diffX // 2: diffX // 2 + Wup, :] = _interp_matrix_np(W1, Wup)
    rhn = jnp.asarray(np.kron(np.eye(N, dtype=np.float32), RH), MXU_DTYPE)  # (N*H2, N*H1)
    rwb = jnp.asarray(_block_diag_w_np(RW, C1), MXU_DTYPE)                  # (C1*W1, C1*W2)

    # conv band matrices, ky taps stacked along K -> one matmul per conv.  conv1's
    # input-channel axis is already the concat order [x2 channels, upsampled-x1 channels].
    w1s = _band_matrices(w1, W2).reshape(3 * (C2 + C1) * W2, Cmid * W2).astype(MXU_DTYPE)
    w2s = _band_matrices(w2, W2).reshape(3 * Cmid * W2, Cout * W2).astype(MXU_DTYPE)

    count = N * H2 * W2
    s1 = jnp.asarray(_group_mean_matrix_np(Cmid, W2, count))
    s2 = jnp.asarray(_group_mean_matrix_np(Cout, W2, count))
    g1b = jnp.repeat(g1.reshape(-1), W2).reshape(1, -1)
    b1v = jnp.repeat(b1.reshape(-1), W2).reshape(1, -1)
    g2b = jnp.repeat(g2.reshape(-1), W2).reshape(1, -1)
    b2v = jnp.repeat(b2.reshape(-1), W2).reshape(1, -1)

    # channel-major lane layout (lane = c*W + w); no wrapper-side H padding any more,
    # the conv halos are handled in-kernel with sublane rolls + masks.
    # TODO(synk): at real UNet sizes keep activations channel-major end-to-end so these
    # relayout transposes (full HBM round trips) disappear from the wrapper.
    x2cm = jnp.transpose(x2, (0, 2, 1, 3)).reshape(N, H2, C2 * W2)
    x1f = jnp.transpose(x1, (0, 2, 1, 3)).reshape(N * H1, C1 * W1)

    out = _pallas_up_double_conv(x2cm, x1f, rwb, rhn, w1s, w2s,
                                 s1, s2, g1b, b1v, g2b, b2v)     # (N, H2, Cout*W2)
    return jnp.transpose(out.reshape(N, H2, Cout, W2), (0, 2, 1, 3))


# --------------------------- pure-JAX reference -------------------------------

def upsample_bilinear_2x_align_corners(x):
    """x: (N, C, H, W) -> (N, C, 2H, 2W), mode='bilinear', align_corners=True."""
    N, C, H, W = x.shape
    Ho, Wo = 2 * H, 2 * W

    def coords(n_in, n_out):
        if n_in == 1 or n_out == 1:
            z = jnp.zeros((n_out,), jnp.int32)
            return z, z, jnp.zeros((n_out,), jnp.float32)
        src = jnp.arange(n_out, dtype=jnp.float32) * (n_in - 1) / (n_out - 1)
        i0 = jnp.clip(jnp.floor(src).astype(jnp.int32), 0, n_in - 1)
        i1 = jnp.clip(i0 + 1, 0, n_in - 1)
        return i0, i1, src - i0.astype(jnp.float32)

    y0, y1, wy = coords(H, Ho)
    x0, x1, wx = coords(W, Wo)
    top, bot = x[:, :, y0, :], x[:, :, y1, :]
    rows = top * (1.0 - wy)[None, None, :, None] + bot * wy[None, None, :, None]
    left, right = rows[:, :, :, x0], rows[:, :, :, x1]
    return left * (1.0 - wx)[None, None, None, :] + right * wx[None, None, None, :]


def _conv3x3_ref(x_nhwc, w):
    return jax.lax.conv_general_dilated(
        x_nhwc, w, window_strides=(1, 1), padding="SAME",
        dimension_numbers=("NHWC", "HWIO", "NHWC"),
        precision=jax.lax.Precision.HIGHEST)


def _bn_relu_ref(y, g, b):
    mean = jnp.mean(y, axis=(0, 1, 2), keepdims=True)
    var = jnp.mean((y - mean) ** 2, axis=(0, 1, 2), keepdims=True)
    yn = (y - mean) * jax.lax.rsqrt(var + EPS)
    yn = yn * g.reshape(1, 1, 1, -1) + b.reshape(1, 1, 1, -1)
    return jnp.maximum(yn, 0.0)


def up_forward_ref(x1, x2, w1, w2, g1, b1, g2, b2):
    x1u = upsample_bilinear_2x_align_corners(x1)
    diffY = x2.shape[2] - x1u.shape[2]
    diffX = x2.shape[3] - x1u.shape[3]
    x1u = jnp.pad(x1u, ((0, 0), (0, 0),
                        (diffY // 2, diffY - diffY // 2),
                        (diffX // 2, diffX - diffX // 2)))
    x = jnp.concatenate([x2, x1u], axis=1)
    xh = jnp.transpose(x, (0, 2, 3, 1))
    y1 = _bn_relu_ref(_conv3x3_ref(xh, w1), g1, b1)
    y2 = _bn_relu_ref(_conv3x3_ref(y1, w2), g2, b2)
    return jnp.transpose(y2, (0, 3, 1, 2))


# ----------------------------------- main -------------------------------------

if __name__ == "__main__":
    key = jax.random.PRNGKey(0)
    k1, k2, kw1, kw2 = jax.random.split(key, 4)

    # Up(in_channels=8, out_channels=8, bilinear=True) -> mid_channels = 4
    N = 2
    in_channels, out_channels = 8, 8
    mid_channels = in_channels // 2
    C1 = in_channels // 2          # channels of x1 (low-res feature map)
    C2 = in_channels - C1          # channels of x2 (skip connection)
    H1 = W1 = 8
    H2 = W2 = 16

    x1 = jax.random.normal(k1, (N, C1, H1, W1), jnp.float32)
    x2 = jax.random.normal(k2, (N, C2, H2, W2), jnp.float32)

    # Conv weights stored HWIO == PyTorch weight.permute(2, 3, 1, 0); BN gamma=1,
    # beta=0 (nn.BatchNorm2d defaults, training-mode statistics).
    w1 = 0.1 * jax.random.normal(kw1, (3, 3, in_channels, mid_channels), jnp.float32)
    w2 = 0.1 * jax.random.normal(kw2, (3, 3, mid_channels, out_channels), jnp.float32)
    g1 = jnp.ones((1, mid_channels), jnp.float32)
    b1 = jnp.zeros((1, mid_channels), jnp.float32)
    g2 = jnp.ones((1, out_channels), jnp.float32)
    b2 = jnp.zeros((1, out_channels), jnp.float32)

    up_fn = jax.jit(up_forward)
    out = jax.block_until_ready(up_fn(x1, x2, w1, w2, g1, b1, g2, b2))
    assert out.shape == (N, out_channels, H2, W2), out.shape

    ref = jax.block_until_ready(up_forward_ref(x1, x2, w1, w2, g1, b1, g2, b2))
    err = float(jnp.max(jnp.abs(out - ref)))
    scale = float(jnp.max(jnp.abs(ref)))
    # bf16 MXU operands (per perf review) give ~1% relative deviation from the
    # HIGHEST-precision f32 reference; compare at 2.5% of the output dynamic range.
    tol = (2.5e-2 * scale + 2.5e-2) if MXU_DTYPE == jnp.bfloat16 else (1e-3 * scale + 1e-3)
    assert err <= tol, (err, scale, tol)

    print("KERNEL_OK")
</pallas_src>

<mosaic_0001>
module attributes {stable_mosaic.version = 11 : i64} {
  func.func @_up_double_conv_kernel(%arg0: i32, %arg1: memref<2x16x64xf32, #tpu.memory_space<vmem>>, %arg2: memref<16x32xf32, #tpu.memory_space<vmem>>, %arg3: memref<32x64xbf16, #tpu.memory_space<vmem>>, %arg4: memref<32x16xbf16, #tpu.memory_space<vmem>>, %arg5: memref<384x64xbf16, #tpu.memory_space<vmem>>, %arg6: memref<192x128xbf16, #tpu.memory_space<vmem>>, %arg7: memref<64x64xf32, #tpu.memory_space<vmem>>, %arg8: memref<128x128xf32, #tpu.memory_space<vmem>>, %arg9: memref<1x64xf32, #tpu.memory_space<vmem>>, %arg10: memref<1x64xf32, #tpu.memory_space<vmem>>, %arg11: memref<1x128xf32, #tpu.memory_space<vmem>>, %arg12: memref<1x128xf32, #tpu.memory_space<vmem>>, %arg13: memref<2x16x128xf32, #tpu.memory_space<vmem>>) attributes {dimension_semantics = [#tpu.dimension_semantics<arbitrary>], iteration_bounds = array<i64: 1>, scalar_prefetch = 0 : i64, scratch_operands = 0 : i64, tpu.core_type = #tpu.core_type<tc>, window_params = [{pipeline_mode = #tpu.pipeline_mode<synchronous>, transform_indices = @transform_0, window_bounds = array<i64: 2, 16, 64>}, {pipeline_mode = #tpu.pipeline_mode<synchronous>, transform_indices = @transform_1, window_bounds = array<i64: 16, 32>}, {pipeline_mode = #tpu.pipeline_mode<synchronous>, transform_indices = @transform_2, window_bounds = array<i64: 32, 64>}, {pipeline_mode = #tpu.pipeline_mode<synchronous>, transform_indices = @transform_3, window_bounds = array<i64: 32, 16>}, {pipeline_mode = #tpu.pipeline_mode<synchronous>, transform_indices = @transform_4, window_bounds = array<i64: 384, 64>}, {pipeline_mode = #tpu.pipeline_mode<synchronous>, transform_indices = @transform_5, window_bounds = array<i64: 192, 128>}, {pipeline_mode = #tpu.pipeline_mode<synchronous>, transform_indices = @transform_6, window_bounds = array<i64: 64, 64>}, {pipeline_mode = #tpu.pipeline_mode<synchronous>, transform_indices = @transform_7, window_bounds = array<i64: 128, 128>}, {pipeline_mode = #tpu.pipeline_mode<synchronous>, transform_indices = @transform_8, window_bounds = array<i64: 1, 64>}, {pipeline_mode = #tpu.pipeline_mode<synchronous>, transform_indices = @transform_9, window_bounds = array<i64: 1, 64>}, {pipeline_mode = #tpu.pipeline_mode<synchronous>, transform_indices = @transform_10, window_bounds = array<i64: 1, 128>}, {pipeline_mode = #tpu.pipeline_mode<synchronous>, transform_indices = @transform_11, window_bounds = array<i64: 1, 128>}, {pipeline_mode = #tpu.pipeline_mode<synchronous>, transform_indices = @transform_12, window_bounds = array<i64: 2, 16, 128>}]} {
    %c0 = arith.constant 0 : index
    %c0_0 = arith.constant 0 : index
    %0 = vector.load %arg2[%c0, %c0_0] : memref<16x32xf32, #tpu.memory_space<vmem>>, vector<16x32xf32>
    %1 = arith.truncf %0 : vector<16x32xf32> to vector<16x32xbf16>
    %c0_1 = arith.constant 0 : index
    %c0_2 = arith.constant 0 : index
    %2 = vector.load %arg3[%c0_1, %c0_2] : memref<32x64xbf16, #tpu.memory_space<vmem>>, vector<32x64xbf16>
    %cst = arith.constant dense<0.000000e+00> : vector<16x64xf32>
    %3 = tpu.matmul %1, %2, %cst {dimension_numbers = #tpu.dot_dimension_numbers<[1], [0], [0], [1], [0, 0, 1, 1], [], []>} : vector<16x32xbf16>, vector<32x64xbf16>, vector<16x64xf32> -> vector<16x64xf32>
    %c0_3 = arith.constant 0 : index
    %c0_4 = arith.constant 0 : index
    %4 = vector.load %arg4[%c0_3, %c0_4] : memref<32x16xbf16, #tpu.memory_space<vmem>>, vector<32x16xbf16>
    %5 = arith.truncf %3 : vector<16x64xf32> to vector<16x64xbf16>
    %cst_5 = arith.constant dense<0.000000e+00> : vector<32x64xf32>
    %6 = tpu.matmul %4, %5, %cst_5 {dimension_numbers = #tpu.dot_dimension_numbers<[1], [0], [0], [1], [0, 0, 1, 1], [], []>} : vector<32x16xbf16>, vector<16x64xbf16>, vector<32x64xf32> -> vector<32x64xf32>
    %c0_6 = arith.constant 0 : index
    %c0_7 = arith.constant 0 : index
    %c0_8 = arith.constant 0 : index
    %7 = vector.load %arg1[%c0_6, %c0_7, %c0_8] : memref<2x16x64xf32, #tpu.memory_space<vmem>>, vector<2x16x64xf32>
    %8 = vector.shape_cast %7 : vector<2x16x64xf32> to vector<32x64xf32>
    %9 = tpu.concatenate %8, %6 in 1 : vector<32x64xf32>, vector<32x64xf32> -> vector<32x128xf32>
    %10 = tpu.iota {dimensions = array<i32: 0>} : vector<32x1xi32>
    %c16_i32 = arith.constant 16 : i32
    %c0_i32 = arith.constant 0 : i32
    %11 = arith.cmpi eq, %c16_i32, %c0_i32 : i32
    %c1_i32 = arith.constant 1 : i32
    %12 = arith.select %11, %c1_i32, %c16_i32 : i32
    %13 = vector.broadcast %12 : i32 to vector<32x1xi32>
    %14 = arith.remsi %10, %13 : vector<32x1xi32>
    %c0_i32_9 = arith.constant 0 : i32
    %15 = vector.broadcast %c0_i32_9 : i32 to vector<32x1xi32>
    %16 = arith.cmpi ne, %14, %15 : vector<32x1xi32>
    %c0_i32_10 = arith.constant 0 : i32
    %17 = vector.broadcast %c0_i32_10 : i32 to vector<32x1xi32>
    %18 = arith.cmpi slt, %14, %17 : vector<32x1xi32>
    %c0_i32_11 = arith.constant 0 : i32
    %19 = arith.cmpi slt, %12, %c0_i32_11 : i32
    %20 = vector.broadcast %19 : i1 to vector<32x1xi1>
    %21 = vector.broadcast %20 : vector<32x1xi1> to vector<32x1xi1>
    %22 = arith.xori %18, %21 : vector<32x1xi1>
    %23 = arith.andi %22, %16 : vector<32x1xi1>
    %24 = vector.broadcast %12 : i32 to vector<32x1xi32>
    %25 = arith.addi %14, %24 : vector<32x1xi32>
    %26 = arith.select %23, %25, %14 : vector<32x1xi1>, vector<32x1xi32>
    %c0_i32_12 = arith.constant 0 : i32
    %27 = vector.broadcast %c0_i32_12 : i32 to vector<32x1xi32>
    %28 = arith.cmpi ne, %26, %27 : vector<32x1xi32>
    %c1_i32_13 = arith.constant 1 : i32
    %29 = tpu.dynamic_rotate %9 by %c1_i32_13 dim 0 : vector<32x128xf32>, i32 -> vector<32x128xf32>
    %cst_14 = arith.constant 0.000000e+00 : f32
    %30 = vector.shape_cast %28 : vector<32x1xi1> to vector<32x1xi1>
    %31 = vector.broadcast %30 : vector<32x1xi1> to vector<32x128xi1>
    %32 = vector.broadcast %cst_14 : f32 to vector<32x128xf32>
    %33 = arith.select %31, %29, %32 : vector<32x128xi1>, vector<32x128xf32>
    %c15_i32 = arith.constant 15 : i32
    %34 = vector.broadcast %c15_i32 : i32 to vector<32x1xi32>
    %35 = arith.cmpi ne, %26, %34 : vector<32x1xi32>
    %c31_i32 = arith.constant 31 : i32
    %36 = tpu.dynamic_rotate %9 by %c31_i32 dim 0 : vector<32x128xf32>, i32 -> vector<32x128xf32>
    %cst_15 = arith.constant 0.000000e+00 : f32
    %37 = vector.shape_cast %35 : vector<32x1xi1> to vector<32x1xi1>
    %38 = vector.broadcast %37 : vector<32x1xi1> to vector<32x128xi1>
    %39 = vector.broadcast %cst_15 : f32 to vector<32x128xf32>
    %40 = arith.select %38, %36, %39 : vector<32x128xi1>, vector<32x128xf32>
    %41 = tpu.concatenate %33, %9, %40 in 1 : vector<32x128xf32>, vector<32x128xf32>, vector<32x128xf32> -> vector<32x384xf32>
    %42 = arith.truncf %41 : vector<32x384xf32> to vector<32x384xbf16>
    %c0_16 = arith.constant 0 : index
    %c0_17 = arith.constant 0 : index
    %43 = vector.load %arg5[%c0_16, %c0_17] : memref<384x64xbf16, #tpu.memory_space<vmem>>, vector<384x64xbf16>
    %cst_18 = arith.constant dense<0.000000e+00> : vector<32x64xf32>
    %44 = tpu.matmul %42, %43, %cst_18 {dimension_numbers = #tpu.dot_dimension_numbers<[1], [0], [0], [1], [0, 0, 1, 1], [], []>} : vector<32x384xbf16>, vector<384x64xbf16>, vector<32x64xf32> -> vector<32x64xf32>
    %cst_19 = arith.constant dense<0.000000e+00> : vector<64xf32>
    %45 = vector.multi_reduction <add>, %44, %cst_19 [0] : vector<32x64xf32> to vector<64xf32>
    %46 = vector.shape_cast %45 : vector<64xf32> to vector<1x64xf32>
    %47 = arith.mulf %44, %44 : vector<32x64xf32>
    %cst_20 = arith.constant dense<0.000000e+00> : vector<64xf32>
    %48 = vector.multi_reduction <add>, %47, %cst_20 [0] : vector<32x64xf32> to vector<64xf32>
    %49 = vector.shape_cast %48 : vector<64xf32> to vector<1x64xf32>
    %c0_21 = arith.constant 0 : index
    %c0_22 = arith.constant 0 : index
    %50 = vector.load %arg7[%c0_21, %c0_22] : memref<64x64xf32, #tpu.memory_space<vmem>>, vector<64x64xf32>
    %cst_23 = arith.constant dense<0.000000e+00> : vector<1x64xf32>
    %51 = tpu.matmul %46, %50, %cst_23 {dimension_numbers = #tpu.dot_dimension_numbers<[1], [0], [0], [1], [0, 0, 1, 1], [], []>} : vector<1x64xf32>, vector<64x64xf32>, vector<1x64xf32> -> vector<1x64xf32>
    %c0_24 = arith.constant 0 : index
    %c0_25 = arith.constant 0 : index
    %52 = vector.load %arg7[%c0_24, %c0_25] : memref<64x64xf32, #tpu.memory_space<vmem>>, vector<64x64xf32>
    %cst_26 = arith.constant dense<0.000000e+00> : vector<1x64xf32>
    %53 = tpu.matmul %49, %52, %cst_26 {dimension_numbers = #tpu.dot_dimension_numbers<[1], [0], [0], [1], [0, 0, 1, 1], [], []>} : vector<1x64xf32>, vector<64x64xf32>, vector<1x64xf32> -> vector<1x64xf32>
    %54 = arith.mulf %51, %51 : vector<1x64xf32>
    %55 = arith.subf %53, %54 : vector<1x64xf32>
    %56 = vector.broadcast %51 : vector<1x64xf32> to vector<32x64xf32>
    %57 = arith.subf %44, %56 : vector<32x64xf32>
    %cst_27 = arith.constant 9.99999974E-6 : f32
    %58 = vector.broadcast %cst_27 : f32 to vector<1x64xf32>
    %59 = arith.addf %55, %58 : vector<1x64xf32>
    %60 = math.rsqrt %59 : vector<1x64xf32>
    %c0_28 = arith.constant 0 : index
    %c0_29 = arith.constant 0 : index
    %61 = vector.load %arg9[%c0_28, %c0_29] : memref<1x64xf32, #tpu.memory_space<vmem>>, vector<1x64xf32>
    %62 = arith.mulf %60, %61 : vector<1x64xf32>
    %63 = vector.broadcast %62 : vector<1x64xf32> to vector<32x64xf32>
    %64 = arith.mulf %57, %63 : vector<32x64xf32>
    %c0_30 = arith.constant 0 : index
    %c0_31 = arith.constant 0 : index
    %65 = vector.load %arg10[%c0_30, %c0_31] : memref<1x64xf32, #tpu.memory_space<vmem>>, vector<1x64xf32>
    %66 = vector.broadcast %65 : vector<1x64xf32> to vector<32x64xf32>
    %67 = arith.addf %64, %66 : vector<32x64xf32>
    %cst_32 = arith.constant 0.000000e+00 : f32
    %68 = vector.broadcast %cst_32 : f32 to vector<32x64xf32>
    %69 = arith.maximumf %67, %68 : vector<32x64xf32>
    %c0_i32_33 = arith.constant 0 : i32
    %70 = vector.broadcast %c0_i32_33 : i32 to vector<32x1xi32>
    %71 = arith.cmpi ne, %26, %70 : vector<32x1xi32>
    %c1_i32_34 = arith.constant 1 : i32
    %72 = tpu.dynamic_rotate %69 by %c1_i32_34 dim 0 : vector<32x64xf32>, i32 -> vector<32x64xf32>
    %cst_35 = arith.constant 0.000000e+00 : f32
    %73 = vector.shape_cast %71 : vector<32x1xi1> to vector<32x1xi1>
    %74 = vector.broadcast %73 : vector<32x1xi1> to vector<32x64xi1>
    %75 = vector.broadcast %cst_35 : f32 to vector<32x64xf32>
    %76 = arith.select %74, %72, %75 : vector<32x64xi1>, vector<32x64xf32>
    %c15_i32_36 = arith.constant 15 : i32
    %77 = vector.broadcast %c15_i32_36 : i32 to vector<32x1xi32>
    %78 = arith.cmpi ne, %26, %77 : vector<32x1xi32>
    %c31_i32_37 = arith.constant 31 : i32
    %79 = tpu.dynamic_rotate %69 by %c31_i32_37 dim 0 : vector<32x64xf32>, i32 -> vector<32x64xf32>
    %cst_38 = arith.constant 0.000000e+00 : f32
    %80 = vector.shape_cast %78 : vector<32x1xi1> to vector<32x1xi1>
    %81 = vector.broadcast %80 : vector<32x1xi1> to vector<32x64xi1>
    %82 = vector.broadcast %cst_38 : f32 to vector<32x64xf32>
    %83 = arith.select %81, %79, %82 : vector<32x64xi1>, vector<32x64xf32>
    %84 = tpu.concatenate %76, %69, %83 in 1 : vector<32x64xf32>, vector<32x64xf32>, vector<32x64xf32> -> vector<32x192xf32>
    %85 = arith.truncf %84 : vector<32x192xf32> to vector<32x192xbf16>
    %c0_39 = arith.constant 0 : index
    %c0_40 = arith.constant 0 : index
    %86 = vector.load %arg6[%c0_39, %c0_40] : memref<192x128xbf16, #tpu.memory_space<vmem>>, vector<192x128xbf16>
    %cst_41 = arith.constant dense<0.000000e+00> : vector<32x128xf32>
    %87 = tpu.matmul %85, %86, %cst_41 {dimension_numbers = #tpu.dot_dimension_numbers<[1], [0], [0], [1], [0, 0, 1, 1], [], []>} : vector<32x192xbf16>, vector<192x128xbf16>, vector<32x128xf32> -> vector<32x128xf32>
    %cst_42 = arith.constant dense<0.000000e+00> : vector<128xf32>
    %88 = vector.multi_reduction <add>, %87, %cst_42 [0] : vector<32x128xf32> to vector<128xf32>
    %89 = vector.shape_cast %88 : vector<128xf32> to vector<1x128xf32>
    %90 = arith.mulf %87, %87 : vector<32x128xf32>
    %cst_43 = arith.constant dense<0.000000e+00> : vector<128xf32>
    %91 = vector.multi_reduction <add>, %90, %cst_43 [0] : vector<32x128xf32> to vector<128xf32>
    %92 = vector.shape_cast %91 : vector<128xf32> to vector<1x128xf32>
    %c0_44 = arith.constant 0 : index
    %c0_45 = arith.constant 0 : index
    %93 = vector.load %arg8[%c0_44, %c0_45] : memref<128x128xf32, #tpu.memory_space<vmem>>, vector<128x128xf32>
    %cst_46 = arith.constant dense<0.000000e+00> : vector<1x128xf32>
    %94 = tpu.matmul %89, %93, %cst_46 {dimension_numbers = #tpu.dot_dimension_numbers<[1], [0], [0], [1], [0, 0, 1, 1], [], []>} : vector<1x128xf32>, vector<128x128xf32>, vector<1x128xf32> -> vector<1x128xf32>
    %c0_47 = arith.constant 0 : index
    %c0_48 = arith.constant 0 : index
    %95 = vector.load %arg8[%c0_47, %c0_48] : memref<128x128xf32, #tpu.memory_space<vmem>>, vector<128x128xf32>
    %cst_49 = arith.constant dense<0.000000e+00> : vector<1x128xf32>
    %96 = tpu.matmul %92, %95, %cst_49 {dimension_numbers = #tpu.dot_dimension_numbers<[1], [0], [0], [1], [0, 0, 1, 1], [], []>} : vector<1x128xf32>, vector<128x128xf32>, vector<1x128xf32> -> vector<1x128xf32>
    %97 = arith.mulf %94, %94 : vector<1x128xf32>
    %98 = arith.subf %96, %97 : vector<1x128xf32>
    %99 = vector.broadcast %94 : vector<1x128xf32> to vector<32x128xf32>
    %100 = arith.subf %87, %99 : vector<32x128xf32>
    %cst_50 = arith.constant 9.99999974E-6 : f32
    %101 = vector.broadcast %cst_50 : f32 to vector<1x128xf32>
    %102 = arith.addf %98, %101 : vector<1x128xf32>
    %103 = math.rsqrt %102 : vector<1x128xf32>
    %c0_51 = arith.constant 0 : index
    %c0_52 = arith.constant 0 : index
    %104 = vector.load %arg11[%c0_51, %c0_52] : memref<1x128xf32, #tpu.memory_space<vmem>>, vector<1x128xf32>
    %105 = arith.mulf %103, %104 : vector<1x128xf32>
    %106 = vector.broadcast %105 : vector<1x128xf32> to vector<32x128xf32>
    %107 = arith.mulf %100, %106 : vector<32x128xf32>
    %c0_53 = arith.constant 0 : index
    %c0_54 = arith.constant 0 : index
    %108 = vector.load %arg12[%c0_53, %c0_54] : memref<1x128xf32, #tpu.memory_space<vmem>>, vector<1x128xf32>
    %109 = vector.broadcast %108 : vector<1x128xf32> to vector<32x128xf32>
    %110 = arith.addf %107, %109 : vector<32x128xf32>
    %cst_55 = arith.constant 0.000000e+00 : f32
    %111 = vector.broadcast %cst_55 : f32 to vector<32x128xf32>
    %112 = arith.maximumf %110, %111 : vector<32x128xf32>
    %113 = vector.shape_cast %112 : vector<32x128xf32> to vector<2x16x128xf32>
    %c0_56 = arith.constant 0 : index
    %c0_57 = arith.constant 0 : index
    %c0_58 = arith.constant 0 : index
    %114 = vector.load %arg13[%c0_56, %c0_57, %c0_58] : memref<2x16x128xf32, #tpu.memory_space<vmem>>, vector<2x16x128xf32>
    tpu.vector_store %arg13[%c0_56, %c0_57, %c0_58], %113 {strides = array<i32>} : memref<2x16x128xf32, #tpu.memory_space<vmem>>, vector<2x16x128xf32>,
    return
  }
  func.func @transform_0(%arg0: i32) -> (i32, i32, i32) {
    %c0_i32 = arith.constant 0 : i32
    %c0_i32_0 = arith.constant 0 : i32
    %c0_i32_1 = arith.constant 0 : i32
    %c0_i32_2 = arith.constant 0 : i32
    return %c0_i32, %c0_i32_0, %c0_i32_1 : i32, i32, i32
  }
  func.func @transform_1(%arg0: i32) -> (i32, i32) {
    %c0_i32 = arith.constant 0 : i32
    %c0_i32_0 = arith.constant 0 : i32
    %c0_i32_1 = arith.constant 0 : i32
    return %c0_i32, %c0_i32_0 : i32, i32
  }
  func.func @transform_2(%arg0: i32) -> (i32, i32) {
    %c0_i32 = arith.constant 0 : i32
    %c0_i32_0 = arith.constant 0 : i32
    %c0_i32_1 = arith.constant 0 : i32
    return %c0_i32, %c0_i32_0 : i32, i32
  }
  func.func @transform_3(%arg0: i32) -> (i32, i32) {
    %c0_i32 = arith.constant 0 : i32
    %c0_i32_0 = arith.constant 0 : i32
    %c0_i32_1 = arith.constant 0 : i32
    return %c0_i32, %c0_i32_0 : i32, i32
  }
  func.func @transform_4(%arg0: i32) -> (i32, i32) {
    %c0_i32 = arith.constant 0 : i32
    %c0_i32_0 = arith.constant 0 : i32
    %c0_i32_1 = arith.constant 0 : i32
    return %c0_i32, %c0_i32_0 : i32, i32
  }
  func.func @transform_5(%arg0: i32) -> (i32, i32) {
    %c0_i32 = arith.constant 0 : i32
    %c0_i32_0 = arith.constant 0 : i32
    %c0_i32_1 = arith.constant 0 : i32
    return %c0_i32, %c0_i32_0 : i32, i32
  }
  func.func @transform_6(%arg0: i32) -> (i32, i32) {
    %c0_i32 = arith.constant 0 : i32
    %c0_i32_0 = arith.constant 0 : i32
    %c0_i32_1 = arith.constant 0 : i32
    return %c0_i32, %c0_i32_0 : i32, i32
  }
  func.func @transform_7(%arg0: i32) -> (i32, i32) {
    %c0_i32 = arith.constant 0 : i32
    %c0_i32_0 = arith.constant 0 : i32
    %c0_i32_1 = arith.constant 0 : i32
    return %c0_i32, %c0_i32_0 : i32, i32
  }
  func.func @transform_8(%arg0: i32) -> (i32, i32) {
    %c0_i32 = arith.constant 0 : i32
    %c0_i32_0 = arith.constant 0 : i32
    %c0_i32_1 = arith.constant 0 : i32
    return %c0_i32, %c0_i32_0 : i32, i32
  }
  func.func @transform_9(%arg0: i32) -> (i32, i32) {
    %c0_i32 = arith.constant 0 : i32
    %c0_i32_0 = arith.constant 0 : i32
    %c0_i32_1 = arith.constant 0 : i32
    return %c0_i32, %c0_i32_0 : i32, i32
  }
  func.func @transform_10(%arg0: i32) -> (i32, i32) {
    %c0_i32 = arith.constant 0 : i32
    %c0_i32_0 = arith.constant 0 : i32
    %c0_i32_1 = arith.constant 0 : i32
    return %c0_i32, %c0_i32_0 : i32, i32
  }
  func.func @transform_11(%arg0: i32) -> (i32, i32) {
    %c0_i32 = arith.constant 0 : i32
    %c0_i32_0 = arith.constant 0 : i32
    %c0_i32_1 = arith.constant 0 : i32
    return %c0_i32, %c0_i32_0 : i32, i32
  }
  func.func @transform_12(%arg0: i32) -> (i32, i32, i32) {
    %c0_i32 = arith.constant 0 : i32
    %c0_i32_0 = arith.constant 0 : i32
    %c0_i32_1 = arith.constant 0 : i32
    %c0_i32_2 = arith.constant 0 : i32
    return %c0_i32, %c0_i32_0, %c0_i32_1 : i32, i32, i32
  }
}

</mosaic_0001>

<llo_original>
// kernel: up_forward.1
$region0: #{up_forward.1}
  #allocation0 [shape = 'u32[]', space=smem, size = 0x4, offset = 0x4, fixed_abs, tag = 'smem constant byte address 0x4 - core index']
  #allocation1 [shape = 'u32[72,128]{1,0:T(1,128)}', space=vmem, size = 0x9000, scoped, tag = 'internal scratch']
  %s0 = inlined_call_operand.vmem [shape: f32[2,16,64], index: 0, kind: input, shape index: {}]
  %s1 = inlined_call_operand.vmem [shape: f32[16,32], index: 1, kind: input, shape index: {}]
  %s2 = inlined_call_operand.vmem [shape: bf16[32,64], index: 2, kind: input, shape index: {}]
  %s3 = inlined_call_operand.vmem [shape: bf16[32,16], index: 3, kind: input, shape index: {}]
  %s4 = inlined_call_operand.vmem [shape: bf16[384,64], index: 4, kind: input, shape index: {}]
  %s5 = inlined_call_operand.vmem [shape: bf16[192,128], index: 5, kind: input, shape index: {}]
  %s6 = inlined_call_operand.vmem [shape: f32[64,64], index: 6, kind: input, shape index: {}]
  %s7 = inlined_call_operand.vmem [shape: f32[128,128], index: 7, kind: input, shape index: {}]
  %s8 = inlined_call_operand.vmem [shape: f32[1,64], index: 8, kind: input, shape index: {}]
  %s9 = inlined_call_operand.vmem [shape: f32[1,64], index: 9, kind: input, shape index: {}]
  %s10 = inlined_call_operand.vmem [shape: f32[1,128], index: 10, kind: input, shape index: {}]
  %s11 = inlined_call_operand.vmem [shape: f32[1,128], index: 11, kind: input, shape index: {}]
  %s12 = inlined_call_operand.vmem [shape: f32[2,16,128], index: 12, kind: output, shape index: {}]
  %s13 = sld [smem:[#allocation0]]
  $region58: #{up_forward.1} parent=0
    _
  %s15 = ssub.s32 1, %s13
  %s16 = scalar_select 0, %s15, %s13
  // Predicated region
  $region2: #{up_forward.1} parent=0 // pred_check
    _
  $region3: #{up_forward.1} parent=0 // pred_check_branch
    %18 = sbr.rel (0) target = $region5
  $region4: #{up_forward.1} parent=0 // pred_region
    _
  $region5: #{up_forward.1} parent=0 // pred_fallthru
    _
  // Predicated region
  $region6: #{up_forward.1} parent=0 // pred_check
    _
  $region7: #{up_forward.1} parent=0 // pred_check_branch
    %20 = sbr.rel (0) target = $region9
  $region8: #{up_forward.1} parent=0 // pred_region
    _
  $region9: #{up_forward.1} parent=0 // pred_fallthru
    _
  // Predicated region
  $region10: #{up_forward.1} parent=0 // pred_check
    _
  $region11: #{up_forward.1} parent=0 // pred_check_branch
    %22 = sbr.rel (0) target = $region13
  $region12: #{up_forward.1} parent=0 // pred_region
    _
  $region13: #{up_forward.1} parent=0 // pred_fallthru
    _
  // Predicated region
  $region14: #{up_forward.1} parent=0 // pred_check
    _
  $region15: #{up_forward.1} parent=0 // pred_check_branch
    %24 = sbr.rel (0) target = $region17
  $region16: #{up_forward.1} parent=0 // pred_region
    _
  $region17: #{up_forward.1} parent=0 // pred_fallthru
    _
  // Predicated region
  $region18: #{up_forward.1} parent=0 // pred_check
    _
  $region19: #{up_forward.1} parent=0 // pred_check_branch
    %26 = sbr.rel (0) target = $region21
  $region20: #{up_forward.1} parent=0 // pred_region
    _
  $region21: #{up_forward.1} parent=0 // pred_fallthru
    _
  // Predicated region
  $region22: #{up_forward.1} parent=0 // pred_check
    _
  $region23: #{up_forward.1} parent=0 // pred_check_branch
    %28 = sbr.rel (0) target = $region25
  $region24: #{up_forward.1} parent=0 // pred_region
    _
  $region25: #{up_forward.1} parent=0 // pred_fallthru
    _
  // Predicated region
  $region26: #{up_forward.1} parent=0 // pred_check
    _
  $region27: #{up_forward.1} parent=0 // pred_check_branch
    %30 = sbr.rel (0) target = $region29
  $region28: #{up_forward.1} parent=0 // pred_region
    _
  $region29: #{up_forward.1} parent=0 // pred_fallthru
    _
  // Predicated region
  $region30: #{up_forward.1} parent=0 // pred_check
    _
  $region31: #{up_forward.1} parent=0 // pred_check_branch
    %32 = sbr.rel (0) target = $region33
  $region32: #{up_forward.1} parent=0 // pred_region
    _
  $region33: #{up_forward.1} parent=0 // pred_fallthru
    _
  // Predicated region
  $region34: #{up_forward.1} parent=0 // pred_check
    _
  $region35: #{up_forward.1} parent=0 // pred_check_branch
    %34 = sbr.rel (0) target = $region37
  $region36: #{up_forward.1} parent=0 // pred_region
    _
  $region37: #{up_forward.1} parent=0 // pred_fallthru
    _
  // Predicated region
  $region38: #{up_forward.1} parent=0 // pred_check
    _
  $region39: #{up_forward.1} parent=0 // pred_check_branch
    %36 = sbr.rel (0) target = $region41
  $region40: #{up_forward.1} parent=0 // pred_region
    _
  $region41: #{up_forward.1} parent=0 // pred_fallthru
    _
  // Predicated region
  $region42: #{up_forward.1} parent=0 // pred_check
    _
  $region43: #{up_forward.1} parent=0 // pred_check_branch
    %38 = sbr.rel (0) target = $region45
  $region44: #{up_forward.1} parent=0 // pred_region
    _
  $region45: #{up_forward.1} parent=0 // pred_fallthru
    _
  // Predicated region
  $region46: #{up_forward.1} parent=0 // pred_check
    _
  $region47: #{up_forward.1} parent=0 // pred_check_branch
    %40 = sbr.rel (0) target = $region49
  $region48: #{up_forward.1} parent=0 // pred_region
    _
  $region49: #{up_forward.1} parent=0 // pred_fallthru
    _
  %v42 = vld [vmem:[%s1] sm:$0xff]
  %v43 = vld [vmem:[%s1 + $0x8] sm:$0xff]
  %v44 = vpack.c.bf16 %v43, %v42
  %v45 = vld [vmem:[%s2] sm:$0xf]
  %v46 = vld [vmem:[%s2 + $0x4] sm:$0xf]
  %v47 = vld [vmem:[%s2 + $0x8] sm:$0xf]
  %v48 = vld [vmem:[%s2 + $0xc] sm:$0xf]
  %v53 = vunpack.c.l.b16 %v45
  %v54 = vunpack.c.l.b16 %v46
  %v55 = vunpack.c.l.b16 %v47
  %v56 = vunpack.c.l.b16 %v48
  %v57 = vpack.c.b16 %v54, %v53
  %v58 = vpack.c.b16 %v56, %v55
  %vm61 = vcmask 261120
  %v63 = vsel %vm61, %v44, 0
  %65 = vmatpush.bf16.msra.mxu0 0
  %66 = vmatpush.bf16.msra.mxu0 0
  %67 = vmatpush.bf16.msra.mxu0 0
  %68 = vmatpush.bf16.msra.mxu0 0
  %69 = vmatpush.bf16.msra.mxu0 0
  %70 = vmatpush.bf16.msra.mxu0 0
  %71 = vmatpush.bf16.msra.mxu0 %v58
  %72 = vmatpush.bf16.msra.mxu0 %v57
  %73 = vmatmul.bf16.gmra.mxu0 %v63
  %v74 = vpop.f32.mrf.mxu0
  %v75 = vadd.f32 0.0, %v74
  %v76 = vpop.f32.mrf.mxu0
  %v77 = vadd.f32 0.0, %v76
  %78 = vdwg.mxu0
  %v79 = vld [vmem:[%s3] sm:$0xf]
  %v80 = vld [vmem:[%s3 + $0x4] sm:$0xf]
  %v81 = vld [vmem:[%s3 + $0x8] sm:$0xf]
  %v82 = vld [vmem:[%s3 + $0xc] sm:$0xf]
  %v83 = vpack.c.bf16 %v77, %v75
  %v88 = vunpack.c.l.b16 %v79
  %v89 = vunpack.c.l.b16 %v80
  %v90 = vunpack.c.l.b16 %v81
  %v91 = vunpack.c.l.b16 %v82
  %v92 = vpack.c.b16 %v89, %v88
  %v93 = vpack.c.b16 %v91, %v90
  %vm94 = vcmask 130048
  %v96 = vsel %vm94, %v92, 0
  %v99 = vsel %vm94, %v93, 0
  %101 = vmatpush.bf16.msra.mxu0 0
  %102 = vmatpush.bf16.msra.mxu0 0
  %103 = vmatpush.bf16.msra.mxu0 0
  %104 = vmatpush.bf16.msra.mxu0 0
  %105 = vmatpush.bf16.msra.mxu0 0
  %106 = vmatpush.bf16.msra.mxu0 0
  %107 = vmatpush.bf16.msra.mxu0 0
  %108 = vmatpush.bf16.msra.mxu0 %v83
  %109 = vmatmul.bf16.gmra.mxu0 %v96
  %v110 = vpop.f32.mrf.mxu0
  %v111 = vadd.f32 0.0, %v110
  %v112 = vpop.f32.mrf.mxu0
  %v113 = vadd.f32 0.0, %v112
  %114 = vmatmul.bf16.gmra.mxu0 %v99
  %v115 = vpop.f32.mrf.mxu0
  %v116 = vadd.f32 0.0, %v115
  %v117 = vpop.f32.mrf.mxu0
  %v118 = vadd.f32 0.0, %v117
  %119 = vdwg.mxu0
  %v120 = vld [vmem:[%s0] sm:$0xff]
  %v121 = vld [vmem:[%s0 + $0x8] sm:$0xff]
  %v122 = vld [vmem:[%s0 + $0x10] sm:$0xff]
  %v123 = vld [vmem:[%s0 + $0x18] sm:$0xff]
  %128 = vrot.lane.b32.xlu0 %v111, 64
  %v129 = vpop.permute.xlu0 %128
  %130 = vrot.lane.b32.xlu0 %v113, 64
  %v131 = vpop.permute.xlu0 %130
  %132 = vrot.lane.b32.xlu0 %v116, 64
  %v133 = vpop.permute.xlu0 %132
  %134 = vrot.lane.b32.xlu0 %v118, 64
  %v135 = vpop.permute.xlu0 %134
  %vm140 = vcmask 523264
  %v141 = vsel %vm140, %v120, %v129
  %v142 = vsel %vm140, %v121, %v131
  %v143 = vsel %vm140, %v122, %v133
  %v144 = vsel %vm140, %v123, %v135
  %v145 = vlaneseq
  %v146 = vshrl.u32 %v145, 7
  %v147 = vadd.s32 %v146, 8
  %v148 = vadd.s32 %v146, 16
  %v149 = vadd.s32 %v146, 24
  %vm150 = vcmp.lt.s32.totalorder %v146, 0
  %v151 = vsub.s32 0, %v146
  %v152 = vsel %vm150, %v151, %v146
  %v153 = vshrl.u32 %v152, 4
  %v154 = vand.u32 %v152, 15
  %v155 = vsub.s32 0, %v154
  %v156 = vsel %vm150, %v155, %v154
  %vm157 = vcmp.lt.s32.totalorder %v147, 0
  %v158 = vsub.s32 0, %v147
  %v159 = vsel %vm157, %v158, %v147
  %v160 = vshrl.u32 %v159, 4
  %v161 = vand.u32 %v159, 15
  %v162 = vsub.s32 0, %v161
  %v163 = vsel %vm157, %v162, %v161
  %vm164 = vcmp.lt.s32.totalorder %v148, 0
  %v165 = vsub.s32 0, %v148
  %v166 = vsel %vm164, %v165, %v148
  %v167 = vshrl.u32 %v166, 4
  %v168 = vand.u32 %v166, 15
  %v169 = vsub.s32 0, %v168
  %v170 = vsel %vm164, %v169, %v168
  %vm171 = vcmp.lt.s32.totalorder %v149, 0
  %v172 = vsub.s32 0, %v149
  %v173 = vsel %vm171, %v172, %v149
  %v174 = vshrl.u32 %v173, 4
  %v175 = vand.u32 %v173, 15
  %v176 = vsub.s32 0, %v175
  %v177 = vsel %vm171, %v176, %v175
  %vm178 = vcmp.ne.s32.totalorder %v156, 0
  %vm179 = vcmp.ne.s32.totalorder %v163, 0
  %vm180 = vcmp.ne.s32.totalorder %v170, 0
  %vm181 = vcmp.ne.s32.totalorder %v177, 0
  %vm182 = vcmp.lt.s32.totalorder %v156, 0
  %vm183 = vcmp.lt.s32.totalorder %v163, 0
  %vm184 = vcmp.lt.s32.totalorder %v170, 0
  %vm185 = vcmp.lt.s32.totalorder %v177, 0
  %vm186 = vmand %vm182, %vm178
  %vm187 = vmand %vm183, %vm179
  %vm188 = vmand %vm184, %vm180
  %vm189 = vmand %vm185, %vm181
  %v190 = vadd.s32 %v156, 16
  %v191 = vadd.s32 %v163, 16
  %v192 = vadd.s32 %v170, 16
  %v193 = vadd.s32 %v177, 16
  %v194 = vsel %vm186, %v190, %v156
  %v195 = vsel %vm187, %v191, %v163
  %v196 = vsel %vm188, %v192, %v170
  %v197 = vsel %vm189, %v193, %v177
  %vm198 = vcmp.ne.s32.totalorder %v194, 0
  %vm199 = vcmp.ne.s32.totalorder %v195, 0
  %vm200 = vcmp.ne.s32.totalorder %v196, 0
  %vm201 = vcmp.ne.s32.totalorder %v197, 0
  %v202 = vrot.slane %v141, 7
  %v203 = vrot.slane %v142, 7
  %v204 = vrot.slane %v143, 7
  %v205 = vrot.slane %v144, 7
  %vm206 = vcmp.lt.s32.totalorder %v146, 1
  %v207 = vsel %vm206, %v204, %v205
  %v208 = vsel %vm206, %v203, %v204
  %v209 = vsel %vm206, %v202, %v203
  %v210 = vsel %vm206, %v205, %v202
  %v211 = vsel %vm198, 1, 0
  %v212 = vsel %vm199, 1, 0
  %v213 = vsel %vm200, 1, 0
  %v214 = vsel %vm201, 1, 0
  %vm215 = vcmp.eq.s32.totalorder %v211, 1
  %vm216 = vcmp.eq.s32.totalorder %v212, 1
  %vm217 = vcmp.eq.s32.totalorder %v213, 1
  %vm218 = vcmp.eq.s32.totalorder %v214, 1
  %v219 = vsel %vm215, %v210, 0.0
  %v220 = vsel %vm216, %v209, 0.0
  %v221 = vsel %vm217, %v208, 0.0
  %v222 = vsel %vm218, %v207, 0.0
  %vm223 = vcmp.ne.s32.totalorder %v194, 15
  %vm224 = vcmp.ne.s32.totalorder %v195, 15
  %vm225 = vcmp.ne.s32.totalorder %v196, 15
  %vm226 = vcmp.ne.s32.totalorder %v197, 15
  %v227 = vrot.slane %v141, 1
  %v228 = vrot.slane %v142, 1
  %v229 = vrot.slane %v143, 1
  %v230 = vrot.slane %v144, 1
  %vm231 = vcmp.lt.s32.totalorder %v146, 7
  %v232 = vsel %vm231, %v229, %v230
  %v233 = vsel %vm231, %v228, %v229
  %v234 = vsel %vm231, %v227, %v228
  %v235 = vsel %vm231, %v230, %v227
  %v236 = vsel %vm223, 1, 0
  %v237 = vsel %vm224, 1, 0
  %v238 = vsel %vm225, 1, 0
  %v239 = vsel %vm226, 1, 0
  %vm240 = vcmp.eq.s32.totalorder %v236, 1
  %vm241 = vcmp.eq.s32.totalorder %v237, 1
  %vm242 = vcmp.eq.s32.totalorder %v238, 1
  %vm243 = vcmp.eq.s32.totalorder %v239, 1
  %v244 = vsel %vm240, %v234, 0.0
  %v245 = vsel %vm241, %v233, 0.0
  %v246 = vsel %vm242, %v232, 0.0
  %v247 = vsel %vm243, %v235, 0.0
  %v248 = vpack.c.bf16 %v220, %v219
  %v249 = vpack.c.bf16 %v142, %v141
  %v250 = vpack.c.bf16 %v245, %v244
  %v251 = vpack.c.bf16 %v222, %v221
  %v252 = vpack.c.bf16 %v144, %v143
  %v253 = vpack.c.bf16 %v247, %v246
  %v254 = vld [vmem:[%s4] sm:$0xf]
  %v255 = vld [vmem:[%s4 + $0x4] sm:$0xf]
  %v256 = vld [vmem:[%s4 + $0x8] sm:$0xf]
  %v257 = vld [vmem:[%s4 + $0xc] sm:$0xf]
  %v258 = vld [vmem:[%s4 + $0x10] sm:$0xf]
  %v259 = vld [vmem:[%s4 + $0x14] sm:$0xf]
  %v260 = vld [vmem:[%s4 + $0x18] sm:$0xf]
  %v261 = vld [vmem:[%s4 + $0x1c] sm:$0xf]
  %v262 = vld [vmem:[%s4 + $0x20] sm:$0xf]
  %v263 = vld [vmem:[%s4 + $0x24] sm:$0xf]
  %v264 = vld [vmem:[%s4 + $0x28] sm:$0xf]
  %v265 = vld [vmem:[%s4 + $0x2c] sm:$0xf]
  %v266 = vld [vmem:[%s4 + $0x30] sm:$0xf]
  %v267 = vld [vmem:[%s4 + $0x34] sm:$0xf]
  %v268 = vld [vmem:[%s4 + $0x38] sm:$0xf]
  %v269 = vld [vmem:[%s4 + $0x3c] sm:$0xf]
  %v270 = vld [vmem:[%s4 + $0x40] sm:$0xf]
  %v271 = vld [vmem:[%s4 + $0x44] sm:$0xf]
  %v272 = vld [vmem:[%s4 + $0x48] sm:$0xf]
  %v273 = vld [vmem:[%s4 + $0x4c] sm:$0xf]
  %v274 = vld [vmem:[%s4 + $0x50] sm:$0xf]
  %v275 = vld [vmem:[%s4 + $0x54] sm:$0xf]
  %v276 = vld [vmem:[%s4 + $0x58] sm:$0xf]
  %v277 = vld [vmem:[%s4 + $0x5c] sm:$0xf]
  %v278 = vld [vmem:[%s4 + $0x60] sm:$0xf]
  %v279 = vld [vmem:[%s4 + $0x64] sm:$0xf]
  %v280 = vld [vmem:[%s4 + $0x68] sm:$0xf]
  %v281 = vld [vmem:[%s4 + $0x6c] sm:$0xf]
  %v282 = vld [vmem:[%s4 + $0x70] sm:$0xf]
  %v283 = vld [vmem:[%s4 + $0x74] sm:$0xf]
  %v284 = vld [vmem:[%s4 + $0x78] sm:$0xf]
  %v285 = vld [vmem:[%s4 + $0x7c] sm:$0xf]
  %v286 = vld [vmem:[%s4 + $0x80] sm:$0xf]
  %v287 = vld [vmem:[%s4 + $0x84] sm:$0xf]
  %v288 = vld [vmem:[%s4 + $0x88] sm:$0xf]
  %v289 = vld [vmem:[%s4 + $0x8c] sm:$0xf]
  %v290 = vld [vmem:[%s4 + $0x90] sm:$0xf]
  %v291 = vld [vmem:[%s4 + $0x94] sm:$0xf]
  %v292 = vld [vmem:[%s4 + $0x98] sm:$0xf]
  %v293 = vld [vmem:[%s4 + $0x9c] sm:$0xf]
  %v294 = vld [vmem:[%s4 + $0xa0] sm:$0xf]
  %v295 = vld [vmem:[%s4 + $0xa4] sm:$0xf]
  %v296 = vld [vmem:[%s4 + $0xa8] sm:$0xf]
  %v297 = vld [vmem:[%s4 + $0xac] sm:$0xf]
  %v298 = vld [vmem:[%s4 + $0xb0] sm:$0xf]
  %v299 = vld [vmem:[%s4 + $0xb4] sm:$0xf]
  %v300 = vld [vmem:[%s4 + $0xb8] sm:$0xf]
  %v301 = vld [vmem:[%s4 + $0xbc] sm:$0xf]
  %v350 = vunpack.c.l.b16 %v254
  %v351 = vunpack.c.l.b16 %v255
  %v352 = vunpack.c.l.b16 %v256
  %v353 = vunpack.c.l.b16 %v257
  %v354 = vunpack.c.l.b16 %v258
  %v355 = vunpack.c.l.b16 %v259
  %v356 = vunpack.c.l.b16 %v260
  %v357 = vunpack.c.l.b16 %v261
  %v358 = vunpack.c.l.b16 %v262
  %v359 = vunpack.c.l.b16 %v263
  %v360 = vunpack.c.l.b16 %v264
  %v361 = vunpack.c.l.b16 %v265
  %v362 = vunpack.c.l.b16 %v266
  %v363 = vunpack.c.l.b16 %v267
  %v364 = vunpack.c.l.b16 %v268
  %v365 = vunpack.c.l.b16 %v269
  %v366 = vunpack.c.l.b16 %v270
  %v367 = vunpack.c.l.b16 %v271
  %v368 = vunpack.c.l.b16 %v272
  %v369 = vunpack.c.l.b16 %v273
  %v370 = vunpack.c.l.b16 %v274
  %v371 = vunpack.c.l.b16 %v275
  %v372 = vunpack.c.l.b16 %v276
  %v373 = vunpack.c.l.b16 %v277
  %v374 = vunpack.c.l.b16 %v278
  %v375 = vunpack.c.l.b16 %v279
  %v376 = vunpack.c.l.b16 %v280
  %v377 = vunpack.c.l.b16 %v281
  %v378 = vunpack.c.l.b16 %v282
  %v379 = vunpack.c.l.b16 %v283
  %v380 = vunpack.c.l.b16 %v284
  %v381 = vunpack.c.l.b16 %v285
  %v382 = vunpack.c.l.b16 %v286
  %v383 = vunpack.c.l.b16 %v287
  %v384 = vunpack.c.l.b16 %v288
  %v385 = vunpack.c.l.b16 %v289
  %v386 = vunpack.c.l.b16 %v290
  %v387 = vunpack.c.l.b16 %v291
  %v388 = vunpack.c.l.b16 %v292
  %v389 = vunpack.c.l.b16 %v293
  %v390 = vunpack.c.l.b16 %v294
  %v391 = vunpack.c.l.b16 %v295
  %v392 = vunpack.c.l.b16 %v296
  %v393 = vunpack.c.l.b16 %v297
  %v394 = vunpack.c.l.b16 %v298
  %v395 = vunpack.c.l.b16 %v299
  %v396 = vunpack.c.l.b16 %v300
  %v397 = vunpack.c.l.b16 %v301
  %v398 = vpack.c.b16 %v351, %v350
  %v399 = vpack.c.b16 %v353, %v352
  %v400 = vpack.c.b16 %v355, %v354
  %v401 = vpack.c.b16 %v357, %v356
  %v402 = vpack.c.b16 %v359, %v358
  %v403 = vpack.c.b16 %v361, %v360
  %v404 = vpack.c.b16 %v363, %v362
  %v405 = vpack.c.b16 %v365, %v364
  %v406 = vpack.c.b16 %v367, %v366
  %v407 = vpack.c.b16 %v369, %v368
  %v408 = vpack.c.b16 %v371, %v370
  %v409 = vpack.c.b16 %v373, %v372
  %v410 = vpack.c.b16 %v375, %v374
  %v411 = vpack.c.b16 %v377, %v376
  %v412 = vpack.c.b16 %v379, %v378
  %v413 = vpack.c.b16 %v381, %v380
  %v414 = vpack.c.b16 %v383, %v382
  %v415 = vpack.c.b16 %v385, %v384
  %v416 = vpack.c.b16 %v387, %v386
  %v417 = vpack.c.b16 %v389, %v388
  %v418 = vpack.c.b16 %v391, %v390
  %v419 = vpack.c.b16 %v393, %v392
  %v420 = vpack.c.b16 %v395, %v394
  %v421 = vpack.c.b16 %v397, %v396
  %446 = vmatpush.bf16.msra.mxu0 %v405
  %447 = vmatpush.bf16.msra.mxu0 %v404
  %448 = vmatpush.bf16.msra.mxu0 %v403
  %449 = vmatpush.bf16.msra.mxu0 %v402
  %450 = vmatpush.bf16.msra.mxu0 %v401
  %451 = vmatpush.bf16.msra.mxu0 %v400
  %452 = vmatpush.bf16.msra.mxu0 %v399
  %453 = vmatpush.bf16.msra.mxu0 %v398
  %454 = vmatmul.bf16.gmra.mxu0 %v248
  %v455 = vpop.f32.mrf.mxu0
  %v456 = vadd.f32 0.0, %v455
  %v457 = vpop.f32.mrf.mxu0
  %v458 = vadd.f32 0.0, %v457
  %459 = vmatmul.bf16.gmra.mxu0 %v251
  %v460 = vpop.f32.mrf.mxu0
  %v461 = vadd.f32 0.0, %v460
  %v462 = vpop.f32.mrf.mxu0
  %v463 = vadd.f32 0.0, %v462
  %464 = vdwg.mxu0
  %465 = vmatpush.bf16.msra.mxu0 %v413
  %466 = vmatpush.bf16.msra.mxu0 %v412
  %467 = vmatpush.bf16.msra.mxu0 %v411
  %468 = vmatpush.bf16.msra.mxu0 %v410
  %469 = vmatpush.bf16.msra.mxu0 %v409
  %470 = vmatpush.bf16.msra.mxu0 %v408
  %471 = vmatpush.bf16.msra.mxu0 %v407
  %472 = vmatpush.bf16.msra.mxu0 %v406
  %473 = vmatmul.bf16.gmra.mxu0 %v249
  %v474 = vpop.f32.mrf.mxu0
  %v475 = vadd.f32 %v456, %v474
  %v476 = vpop.f32.mrf.mxu0
  %v477 = vadd.f32 %v458, %v476
  %478 = vmatmul.bf16.gmra.mxu0 %v252
  %v479 = vpop.f32.mrf.mxu0
  %v480 = vadd.f32 %v461, %v479
  %v481 = vpop.f32.mrf.mxu0
  %v482 = vadd.f32 %v463, %v481
  %483 = vdwg.mxu0
  %484 = vmatpush.bf16.msra.mxu0 %v421
  %485 = vmatpush.bf16.msra.mxu0 %v420
  %486 = vmatpush.bf16.msra.mxu0 %v419
  %487 = vmatpush.bf16.msra.mxu0 %v418
  %488 = vmatpush.bf16.msra.mxu0 %v417
  %489 = vmatpush.bf16.msra.mxu0 %v416
  %490 = vmatpush.bf16.msra.mxu0 %v415
  %491 = vmatpush.bf16.msra.mxu0 %v414
  %492 = vmatmul.bf16.gmra.mxu0 %v250
  %v493 = vpop.f32.mrf.mxu0
  %v494 = vadd.f32 %v475, %v493
  %v495 = vpop.f32.mrf.mxu0
  %v496 = vadd.f32 %v477, %v495
  %497 = vmatmul.bf16.gmra.mxu0 %v253
  %v498 = vpop.f32.mrf.mxu0
  %v499 = vadd.f32 %v480, %v498
  %v500 = vpop.f32.mrf.mxu0
  %v501 = vadd.f32 %v482, %v500
  %502 = vdwg.mxu0
  %v503 = vsel %vm140, %v494, 0.0
  %v504 = vsel %vm140, %v496, 0.0
  %v505 = vadd.f32 %v503, %v504
  %v506 = vsel %vm140, %v499, 0.0
  %v507 = vadd.f32 %v505, %v506
  %v508 = vsel %vm140, %v501, 0.0
  %v509 = vadd.f32 %v507, %v508
  %v510 = vrot.slane %v509, 4
  %v511 = vadd.f32 %v509, %v510
  %v512 = vrot.slane %v511, 2
  %v513 = vadd.f32 %v511, %v512
  %v514 = vrot.slane %v513, 1
  %v515 = vadd.f32 %v513, %v514
  %v516 = vmul.f32 %v494, %v494
  %v517 = vmul.f32 %v496, %v496
  %v518 = vmul.f32 %v499, %v499
  %v519 = vmul.f32 %v501, %v501
  %v520 = vsel %vm140, %v516, 0.0
  %v521 = vsel %vm140, %v517, 0.0
  %v522 = vadd.f32 %v520, %v521
  %v523 = vsel %vm140, %v518, 0.0
  %v524 = vadd.f32 %v522, %v523
  %v525 = vsel %vm140, %v519, 0.0
  %v526 = vadd.f32 %v524, %v525
  %v527 = vrot.slane %v526, 4
  %v528 = vadd.f32 %v526, %v527
  %v529 = vrot.slane %v528, 2
  %v530 = vadd.f32 %v528, %v529
  %v531 = vrot.slane %v530, 1
  %v532 = vadd.f32 %v530, %v531
  %v533 = vld [vmem:[%s6] sm:$0xff]
  %v534 = vld [vmem:[%s6 + $0x8] sm:$0xff]
  %v535 = vld [vmem:[%s6 + $0x10] sm:$0xff]
  %v536 = vld [vmem:[%s6 + $0x18] sm:$0xff]
  %v537 = vld [vmem:[%s6 + $0x20] sm:$0xff]
  %v538 = vld [vmem:[%s6 + $0x28] sm:$0xff]
  %v539 = vld [vmem:[%s6 + $0x30] sm:$0xff]
  %v540 = vld [vmem:[%s6 + $0x38] sm:$0xff]
  %v542 = vsel %vm140, %v515, 0
  %544 = vmatpush.msra.mxu0 0.0
  %545 = vmatpush.msra.mxu0 0.0
  %546 = vmatpush.msra.mxu0 0.0
  %547 = vmatpush.msra.mxu0 0.0
  %548 = vmatpush.msra.mxu0 0.0
  %549 = vmatpush.msra.mxu0 0.0
  %550 = vmatpush.msra.mxu0 0.0
  %551 = vmatpush.msra.mxu0 0.0
  %552 = vmatpush.msra.mxu0 %v540
  %553 = vmatpush.msra.mxu0 %v539
  %554 = vmatpush.msra.mxu0 %v538
  %555 = vmatpush.msra.mxu0 %v537
  %556 = vmatpush.msra.mxu0 %v536
  %557 = vmatpush.msra.mxu0 %v535
  %558 = vmatpush.msra.mxu0 %v534
  %559 = vmatpush.msra.mxu0 %v533
  %560 = vmatmul.f32.gmra.mxu0 %v542
  %v561 = vpop.f32.mrf.mxu0
  %v562 = vadd.f32 0.0, %v561
  %563 = vdwg.mxu0
  %v565 = vsel %vm140, %v532, 0
  %567 = vmatpush.msra.mxu0 0.0
  %568 = vmatpush.msra.mxu0 0.0
  %569 = vmatpush.msra.mxu0 0.0
  %570 = vmatpush.msra.mxu0 0.0
  %571 = vmatpush.msra.mxu0 0.0
  %572 = vmatpush.msra.mxu0 0.0
  %573 = vmatpush.msra.mxu0 0.0
  %574 = vmatpush.msra.mxu0 0.0
  %575 = vmatpush.msra.mxu0 %v540
  %576 = vmatpush.msra.mxu0 %v539
  %577 = vmatpush.msra.mxu0 %v538
  %578 = vmatpush.msra.mxu0 %v537
  %579 = vmatpush.msra.mxu0 %v536
  %580 = vmatpush.msra.mxu0 %v535
  %581 = vmatpush.msra.mxu0 %v534
  %582 = vmatpush.msra.mxu0 %v533
  %583 = vmatmul.f32.gmra.mxu0 %v565
  %v584 = vpop.f32.mrf.mxu0
  %v585 = vadd.f32 0.0, %v584
  %586 = vdwg.mxu0
  %v587 = vmul.f32 %v562, %v562
  %v588 = vsub.f32 %v585, %v587
  %v589 = vperm.slane %v562, 0
  %v590 = vsub.f32 %v494, %v589
  %v591 = vsub.f32 %v496, %v589
  %v592 = vsub.f32 %v499, %v589
  %v593 = vsub.f32 %v501, %v589
  %v594 = vadd.f32 %v588, 1e-05
  %v595 = vrsqrt.pop %v594
  %v596 = vmul.f32 %v595, %v594
  %v597 = vmul.f32 %v596, %v595
  %v598 = vmul.f32 0.5, %v597
  %v599 = vsub.f32 1.5, %v598
  %v600 = vmul.f32 %v595, %v599
  %vm601 = vweird.f32 %v594
  %vm602 = vweird.f32 %v595
  %vm603 = vmor %vm601, %vm602
  %v604 = vsel %vm603, %v595, %v600
  %v605 = vld [vmem:[%s8] sm:$0x1]
  %v606 = vmul.f32 %v604, %v605
  %v607 = vperm.slane %v606, 0
  %v608 = vmul.f32 %v590, %v607
  %v609 = vmul.f32 %v591, %v607
  %v610 = vmul.f32 %v592, %v607
  %v611 = vmul.f32 %v593, %v607
  %v612 = vld [vmem:[%s9] sm:$0x1]
  %v614 = vperm.slane %v612, 0
  %v616 = vadd.f32 %v608, %v614
  %v617 = vadd.f32 %v609, %v614
  %v618 = vadd.f32 %v610, %v614
  %v619 = vadd.f32 %v611, %v614
  %v620 = vmax.f32 %v616, 0.0
  %v621 = vmax.f32 %v617, 0.0
  %v622 = vmax.f32 %v618, 0.0
  %v623 = vmax.f32 %v619, 0.0
  %v624 = vrot.slane %v620, 7
  %v625 = vrot.slane %v621, 7
  %v626 = vrot.slane %v622, 7
  %v627 = vrot.slane %v623, 7
  %v628 = vsel %vm206, %v626, %v627
  %v629 = vsel %vm206, %v625, %v626
  %v630 = vsel %vm206, %v624, %v625
  %v631 = vsel %vm206, %v627, %v624
  %v632 = vsel %vm215, %v631, 0.0
  %v633 = vsel %vm216, %v630, 0.0
  %v634 = vsel %vm217, %v629, 0.0
  %v635 = vsel %vm218, %v628, 0.0
  %v636 = vrot.slane %v620, 1
  %v637 = vrot.slane %v621, 1
  %v638 = vrot.slane %v622, 1
  %v639 = vrot.slane %v623, 1
  %v640 = vsel %vm231, %v638, %v639
  %v641 = vsel %vm231, %v637, %v638
  %v642 = vsel %vm231, %v636, %v637
  %v643 = vsel %vm231, %v639, %v636
  %v644 = vsel %vm240, %v642, 0.0
  %v645 = vsel %vm241, %v641, 0.0
  %v646 = vsel %vm242, %v640, 0.0
  %v647 = vsel %vm243, %v643, 0.0
  %652 = vrot.lane.b32.xlu0 %v620, 64
  %v653 = vpop.permute.xlu0 %652
  %654 = vrot.lane.b32.xlu0 %v621, 64
  %v655 = vpop.permute.xlu0 %654
  %656 = vrot.lane.b32.xlu0 %v622, 64
  %v657 = vpop.permute.xlu0 %656
  %658 = vrot.lane.b32.xlu0 %v623, 64
  %v659 = vpop.permute.xlu0 %658
  %v664 = vsel %vm140, %v632, %v653
  %v665 = vsel %vm140, %v633, %v655
  %v666 = vsel %vm140, %v634, %v657
  %v667 = vsel %vm140, %v635, %v659
  %v668 = vpack.c.bf16 %v665, %v664
  %v669 = vpack.c.bf16 %v645, %v644
  %v670 = vpack.c.bf16 %v667, %v666
  %v671 = vpack.c.bf16 %v647, %v646
  %v672 = vld [vmem:[%s5] sm:$0xf]
  %v673 = vld [vmem:[%s5 + $0x4] sm:$0xf]
  %v674 = vld [vmem:[%s5 + $0x8] sm:$0xf]
  %v675 = vld [vmem:[%s5 + $0xc] sm:$0xf]
  %v676 = vld [vmem:[%s5 + $0x10] sm:$0xf]
  %v677 = vld [vmem:[%s5 + $0x14] sm:$0xf]
  %v678 = vld [vmem:[%s5 + $0x18] sm:$0xf]
  %v679 = vld [vmem:[%s5 + $0x1c] sm:$0xf]
  %v680 = vld [vmem:[%s5 + $0x20] sm:$0xf]
  %v681 = vld [vmem:[%s5 + $0x24] sm:$0xf]
  %v682 = vld [vmem:[%s5 + $0x28] sm:$0xf]
  %v683 = vld [vmem:[%s5 + $0x2c] sm:$0xf]
  %v684 = vld [vmem:[%s5 + $0x30] sm:$0xf]
  %v685 = vld [vmem:[%s5 + $0x34] sm:$0xf]
  %v686 = vld [vmem:[%s5 + $0x38] sm:$0xf]
  %v687 = vld [vmem:[%s5 + $0x3c] sm:$0xf]
  %v688 = vld [vmem:[%s5 + $0x40] sm:$0xf]
  %v689 = vld [vmem:[%s5 + $0x44] sm:$0xf]
  %v690 = vld [vmem:[%s5 + $0x48] sm:$0xf]
  %v691 = vld [vmem:[%s5 + $0x4c] sm:$0xf]
  %v692 = vld [vmem:[%s5 + $0x50] sm:$0xf]
  %v693 = vld [vmem:[%s5 + $0x54] sm:$0xf]
  %v694 = vld [vmem:[%s5 + $0x58] sm:$0xf]
  %v695 = vld [vmem:[%s5 + $0x5c] sm:$0xf]
  %v720 = vunpack.c.l.b16 %v672
  %v721 = vunpack.c.l.b16 %v673
  %v722 = vunpack.c.l.b16 %v674
  %v723 = vunpack.c.l.b16 %v675
  %v724 = vunpack.c.l.b16 %v676
  %v725 = vunpack.c.l.b16 %v677
  %v726 = vunpack.c.l.b16 %v678
  %v727 = vunpack.c.l.b16 %v679
  %v728 = vunpack.c.l.b16 %v680
  %v729 = vunpack.c.l.b16 %v681
  %v730 = vunpack.c.l.b16 %v682
  %v731 = vunpack.c.l.b16 %v683
  %v732 = vunpack.c.l.b16 %v684
  %v733 = vunpack.c.l.b16 %v685
  %v734 = vunpack.c.l.b16 %v686
  %v735 = vunpack.c.l.b16 %v687
  %v736 = vunpack.c.l.b16 %v688
  %v737 = vunpack.c.l.b16 %v689
  %v738 = vunpack.c.l.b16 %v690
  %v739 = vunpack.c.l.b16 %v691
  %v740 = vunpack.c.l.b16 %v692
  %v741 = vunpack.c.l.b16 %v693
  %v742 = vunpack.c.l.b16 %v694
  %v743 = vunpack.c.l.b16 %v695
  %v744 = vpack.c.b16 %v721, %v720
  %v745 = vpack.c.b16 %v723, %v722
  %v746 = vpack.c.b16 %v725, %v724
  %v747 = vpack.c.b16 %v727, %v726
  %v748 = vpack.c.b16 %v729, %v728
  %v749 = vpack.c.b16 %v731, %v730
  %v750 = vpack.c.b16 %v733, %v732
  %v751 = vpack.c.b16 %v735, %v734
  %v752 = vpack.c.b16 %v737, %v736
  %v753 = vpack.c.b16 %v739, %v738
  %v754 = vpack.c.b16 %v741, %v740
  %v755 = vpack.c.b16 %v743, %v742
  %v769 = vsel %vm140, %v669, 0
  %v772 = vsel %vm140, %v671, 0
  %774 = vmatpush.bf16.msra.mxu0 %v751
  %775 = vmatpush.bf16.msra.mxu0 %v750
  %776 = vmatpush.bf16.msra.mxu0 %v749
  %777 = vmatpush.bf16.msra.mxu0 %v748
  %778 = vmatpush.bf16.msra.mxu0 %v747
  %779 = vmatpush.bf16.msra.mxu0 %v746
  %780 = vmatpush.bf16.msra.mxu0 %v745
  %781 = vmatpush.bf16.msra.mxu0 %v744
  %782 = vmatmul.bf16.gmra.mxu0 %v668
  %v783 = vpop.f32.mrf.mxu0
  %v784 = vadd.f32 0.0, %v783
  %v785 = vpop.f32.mrf.mxu0
  %v786 = vadd.f32 0.0, %v785
  %787 = vmatmul.bf16.gmra.mxu0 %v670
  %v788 = vpop.f32.mrf.mxu0
  %v789 = vadd.f32 0.0, %v788
  %v790 = vpop.f32.mrf.mxu0
  %v791 = vadd.f32 0.0, %v790
  %792 = vdwg.mxu0
  %793 = vmatpush.bf16.msra.mxu0 0
  %794 = vmatpush.bf16.msra.mxu0 0
  %795 = vmatpush.bf16.msra.mxu0 0
  %796 = vmatpush.bf16.msra.mxu0 0
  %797 = vmatpush.bf16.msra.mxu0 %v755
  %798 = vmatpush.bf16.msra.mxu0 %v754
  %799 = vmatpush.bf16.msra.mxu0 %v753
  %800 = vmatpush.bf16.msra.mxu0 %v752
  %801 = vmatmul.bf16.gmra.mxu0 %v769
  %v802 = vpop.f32.mrf.mxu0
  %v803 = vadd.f32 %v784, %v802
  %v804 = vpop.f32.mrf.mxu0
  %v805 = vadd.f32 %v786, %v804
  %806 = vmatmul.bf16.gmra.mxu0 %v772
  %v807 = vpop.f32.mrf.mxu0
  %v808 = vadd.f32 %v789, %v807
  %v809 = vpop.f32.mrf.mxu0
  %v810 = vadd.f32 %v791, %v809
  %811 = vdwg.mxu0
  %v812 = vadd.f32 %v803, %v805
  %v813 = vadd.f32 %v812, %v808
  %v814 = vadd.f32 %v813, %v810
  %v815 = vrot.slane %v814, 4
  %v816 = vadd.f32 %v814, %v815
  %v817 = vrot.slane %v816, 2
  %v818 = vadd.f32 %v816, %v817
  %v819 = vrot.slane %v818, 1
  %v820 = vadd.f32 %v818, %v819
  %v821 = vmul.f32 %v803, %v803
  %v822 = vmul.f32 %v805, %v805
  %v823 = vmul.f32 %v808, %v808
  %v824 = vmul.f32 %v810, %v810
  %v825 = vadd.f32 %v821, %v822
  %v826 = vadd.f32 %v825, %v823
  %v827 = vadd.f32 %v826, %v824
  %v828 = vrot.slane %v827, 4
  %v829 = vadd.f32 %v827, %v828
  %v830 = vrot.slane %v829, 2
  %v831 = vadd.f32 %v829, %v830
  %v832 = vrot.slane %v831, 1
  %v833 = vadd.f32 %v831, %v832
  %v834 = vld [vmem:[%s7] sm:$0xff]
  %v835 = vld [vmem:[%s7 + $0x8] sm:$0xff]
  %v836 = vld [vmem:[%s7 + $0x10] sm:$0xff]
  %v837 = vld [vmem:[%s7 + $0x18] sm:$0xff]
  %v838 = vld [vmem:[%s7 + $0x20] sm:$0xff]
  %v839 = vld [vmem:[%s7 + $0x28] sm:$0xff]
  %v840 = vld [vmem:[%s7 + $0x30] sm:$0xff]
  %v841 = vld [vmem:[%s7 + $0x38] sm:$0xff]
  %v842 = vld [vmem:[%s7 + $0x40] sm:$0xff]
  %v843 = vld [vmem:[%s7 + $0x48] sm:$0xff]
  %v844 = vld [vmem:[%s7 + $0x50] sm:$0xff]
  %v845 = vld [vmem:[%s7 + $0x58] sm:$0xff]
  %v846 = vld [vmem:[%s7 + $0x60] sm:$0xff]
  %v847 = vld [vmem:[%s7 + $0x68] sm:$0xff]
  %v848 = vld [vmem:[%s7 + $0x70] sm:$0xff]
  %v849 = vld [vmem:[%s7 + $0x78] sm:$0xff]
  %850 = vmatpush.msra.mxu0 %v849
  %851 = vmatpush.msra.mxu0 %v848
  %852 = vmatpush.msra.mxu0 %v847
  %853 = vmatpush.msra.mxu0 %v846
  %854 = vmatpush.msra.mxu0 %v845
  %855 = vmatpush.msra.mxu0 %v844
  %856 = vmatpush.msra.mxu0 %v843
  %857 = vmatpush.msra.mxu0 %v842
  %858 = vmatpush.msra.mxu0 %v841
  %859 = vmatpush.msra.mxu0 %v840
  %860 = vmatpush.msra.mxu0 %v839
  %861 = vmatpush.msra.mxu0 %v838
  %862 = vmatpush.msra.mxu0 %v837
  %863 = vmatpush.msra.mxu0 %v836
  %864 = vmatpush.msra.mxu0 %v835
  %865 = vmatpush.msra.mxu0 %v834
  %866 = vmatmul.f32.gmra.mxu0 %v820
  %v867 = vpop.f32.mrf.mxu0
  %v868 = vadd.f32 0.0, %v867
  %869 = vdwg.mxu0
  %870 = vmatpush.msra.mxu0 %v849
  %871 = vmatpush.msra.mxu0 %v848
  %872 = vmatpush.msra.mxu0 %v847
  %873 = vmatpush.msra.mxu0 %v846
  %874 = vmatpush.msra.mxu0 %v845
  %875 = vmatpush.msra.mxu0 %v844
  %876 = vmatpush.msra.mxu0 %v843
  %877 = vmatpush.msra.mxu0 %v842
  %878 = vmatpush.msra.mxu0 %v841
  %879 = vmatpush.msra.mxu0 %v840
  %880 = vmatpush.msra.mxu0 %v839
  %881 = vmatpush.msra.mxu0 %v838
  %882 = vmatpush.msra.mxu0 %v837
  %883 = vmatpush.msra.mxu0 %v836
  %884 = vmatpush.msra.mxu0 %v835
  %885 = vmatpush.msra.mxu0 %v834
  %886 = vmatmul.f32.gmra.mxu0 %v833
  %v887 = vpop.f32.mrf.mxu0
  %v888 = vadd.f32 0.0, %v887
  %889 = vdwg.mxu0
  %v890 = vmul.f32 %v868, %v868
  %v891 = vsub.f32 %v888, %v890
  %v892 = vperm.slane %v868, 0
  %v893 = vsub.f32 %v803, %v892
  %v894 = vsub.f32 %v805, %v892
  %v895 = vsub.f32 %v808, %v892
  %v896 = vsub.f32 %v810, %v892
  %v897 = vadd.f32 %v891, 1e-05
  %v898 = vrsqrt.pop %v897
  %v899 = vmul.f32 %v898, %v897
  %v900 = vmul.f32 %v899, %v898
  %v901 = vmul.f32 0.5, %v900
  %v902 = vsub.f32 1.5, %v901
  %v903 = vmul.f32 %v898, %v902
  %vm904 = vweird.f32 %v897
  %vm905 = vweird.f32 %v898
  %vm906 = vmor %vm904, %vm905
  %v907 = vsel %vm906, %v898, %v903
  %v908 = vld [vmem:[%s10] sm:$0x1]
  %v909 = vmul.f32 %v907, %v908
  %v910 = vperm.slane %v909, 0
  %v911 = vmul.f32 %v893, %v910
  %v912 = vmul.f32 %v894, %v910
  %v913 = vmul.f32 %v895, %v910
  %v914 = vmul.f32 %v896, %v910
  %v915 = vld [vmem:[%s11] sm:$0x1]
  %v917 = vperm.slane %v915, 0
  %v919 = vadd.f32 %v911, %v917
  %v920 = vadd.f32 %v912, %v917
  %v921 = vadd.f32 %v913, %v917
  %v922 = vadd.f32 %v914, %v917
  %v923 = vmax.f32 %v919, 0.0
  %v924 = vmax.f32 %v920, 0.0
  %v925 = vmax.f32 %v921, 0.0
  %v926 = vmax.f32 %v922, 0.0
  %927 = vst [vmem:[%s12] sm:$0xff] %v923
  %928 = vst [vmem:[%s12 + $0x8] sm:$0xff] %v924
  %929 = vst [vmem:[%s12 + $0x10] sm:$0xff] %v925
  %930 = vst [vmem:[%s12 + $0x18] sm:$0xff] %v926
  // Predicated region
  $region50: #{up_forward.1} parent=0 // pred_check
    _
  $region51: #{up_forward.1} parent=0 // pred_check_branch
    %932 = sbr.rel (0) target = $region53
  $region52: #{up_forward.1} parent=0 // pred_region
    _
  $region53: #{up_forward.1} parent=0 // pred_fallthru
    _
  // Predicated region
  $region54: #{up_forward.1} parent=0 // pred_check
    _
  $region55: #{up_forward.1} parent=0 // pred_check_branch
    %934 = sbr.rel (0) target = $region57
  $region56: #{up_forward.1} parent=0 // pred_region
    _
  $region57: #{up_forward.1} parent=0 // pred_fallthru
    _

</llo_original>
